<compile_context>
chip_gen: v5e
topology: v5e:2x2
jax: 0.10.0
libtpu: 0.0.40
codegen_flags: <defaults>
</compile_context>

<pallas_src>
import functools

import jax
import jax.numpy as jnp
from jax.experimental import pallas as pl
from jax.experimental.pallas import tpu as pltpu


def mha_kernel(q_ref, k_ref, v_ref,
               wqkv_ref, bqkv_ref, wo_ref, bo_ref, ln_w_ref, ln_b_ref,
               out_ref, attn_scratch,
               *, num_heads, causal, eps):
    # Per-grid-step refs: q/k/v/out are (1, S, E) blocks (one batch element).
    # NOTE: num_heads/causal/eps are plain Python scalars (int/bool/float) so the
    # kernel captures no traced constants (fixes the previous trace error).
    x_q = q_ref[0]                                    # (S, E) f32 -- residual input
    S, E = x_q.shape
    hd = E // num_heads
    inv_scale = 1.0 / float(hd) ** 0.5                # python float -> jaxpr literal

    # bf16 operands for all MXU work (accumulation stays f32).
    xq = x_q.astype(jnp.bfloat16)
    xk = k_ref[0].astype(jnp.bfloat16)
    xv = v_ref[0].astype(jnp.bfloat16)

    # Projections. Weights arrive pre-transposed as (E_in, E_out): no .T in-kernel.
    # (A single fused (E, 3E) matmul is not used because query/key/value are three
    #  *different* input tensors in this module; the weights are still passed as
    #  one stacked (3, E, E) tensor -> one DMA instead of three.)
    q = jnp.dot(xq, wqkv_ref[0], preferred_element_type=jnp.float32) + bqkv_ref[0]
    k = jnp.dot(xk, wqkv_ref[1], preferred_element_type=jnp.float32) + bqkv_ref[1]
    v = jnp.dot(xv, wqkv_ref[2], preferred_element_type=jnp.float32) + bqkv_ref[2]

    # Fold 1/sqrt(hd) into q once instead of dividing every (S, S) score tile.
    q = q * inv_scale

    # Hoist the causal mask out of the per-head loop (built once, reused by all heads).
    if causal:
        row = jax.lax.broadcasted_iota(jnp.int32, (S, S), 0)
        col = jax.lax.broadcasted_iota(jnp.int32, (S, S), 1)
        keep = row >= col

    # Per-head attention. Head outputs are written straight into a VMEM scratch
    # slab (no jnp.concatenate, bounded live ranges).
    # TODO(synk): for long sequences add a KV grid axis with online softmax
    # (flash-style m/l/acc scratch) so (S, S) scores never fully materialize.
    for h in range(num_heads):
        sl = slice(h * hd, (h + 1) * hd)
        qh = q[:, sl].astype(jnp.bfloat16)            # (S, hd)
        kh = k[:, sl].astype(jnp.bfloat16)            # (S, hd)
        vh = v[:, sl].astype(jnp.bfloat16)            # (S, hd)

        # qh @ kh^T without an explicit transpose: contract the last dims.
        scores = jax.lax.dot_general(
            qh, kh, dimension_numbers=(((1,), (1,)), ((), ())),
            preferred_element_type=jnp.float32)        # (S, S) f32

        if causal:
            scores = jnp.where(keep, scores, float("-inf"))

        # Softmax in f32; denominator via EUP approx reciprocal (free slot).
        m = jnp.max(scores, axis=-1, keepdims=True)
        p = jnp.exp(scores - m)
        w = p * pl.reciprocal(jnp.sum(p, axis=-1, keepdims=True), approx=True)
        # dropout: identity at inference time.

        attn_scratch[:, sl] = jnp.dot(w.astype(jnp.bfloat16), vh,
                                      preferred_element_type=jnp.float32)

    # Output projection (pre-transposed bf16 weight), then residual + LayerNorm in f32.
    attn = jnp.dot(attn_scratch[...].astype(jnp.bfloat16), wo_ref[...],
                   preferred_element_type=jnp.float32) + bo_ref[...]

    res = x_q + attn
    mean = jnp.mean(res, axis=-1, keepdims=True)
    var = jnp.mean((res - mean) ** 2, axis=-1, keepdims=True)
    y = (res - mean) * jax.lax.rsqrt(var + eps)
    y = y * ln_w_ref[...] + ln_b_ref[...]

    out_ref[0] = y.astype(out_ref.dtype)


def multi_head_attention(query, key, value, params, *, num_heads, causal=False):
    """query/key/value: (B, S, E) float32. Returns (B, S, E)."""
    B, S, E = query.shape

    # One-time XLA-level weight prep: PyTorch (out, in) -> (in, out), cast to bf16.
    w_qkv = jnp.stack([params["wq"].T, params["wk"].T, params["wv"].T]
                      ).astype(jnp.bfloat16)                       # (3, E, E) bf16
    b_qkv = jnp.stack([params["bq"], params["bk"], params["bv"]])  # (3, 1, E) f32
    w_o = params["wo"].T.astype(jnp.bfloat16)                      # (E, E)   bf16

    kernel = functools.partial(mha_kernel, num_heads=int(num_heads),
                               causal=bool(causal), eps=1e-5)

    # NOTE: with E < 128 (E=32 in the test) the lane dim is below a full vreg and
    # stores are masked; production sizes should keep E a multiple of 128.
    seq_spec = pl.BlockSpec((1, S, E), lambda b: (b, 0, 0))
    wqkv_spec = pl.BlockSpec((3, E, E), lambda b: (0, 0, 0))
    bqkv_spec = pl.BlockSpec((3, 1, E), lambda b: (0, 0, 0))
    mat_spec = pl.BlockSpec((E, E), lambda b: (0, 0))
    vec_spec = pl.BlockSpec((1, E), lambda b: (0, 0))

    return pl.pallas_call(
        kernel,
        out_shape=jax.ShapeDtypeStruct((B, S, E), query.dtype),
        grid_spec=pltpu.PrefetchScalarGridSpec(
            num_scalar_prefetch=0,
            grid=(B,),
            in_specs=[seq_spec, seq_spec, seq_spec,
                      wqkv_spec, bqkv_spec,   # stacked Wq/Wk/Wv (pre-T, bf16) + biases
                      mat_spec, vec_spec,     # Wo (pre-T, bf16), bo
                      vec_spec, vec_spec],    # ln_w, ln_b
            out_specs=seq_spec,
            scratch_shapes=[pltpu.VMEM((S, E), jnp.float32)],   # per-step attn slab
        ),
        compiler_params=pltpu.CompilerParams(
            dimension_semantics=("parallel",),
            vmem_limit_bytes=48 * 1024 * 1024,   # explicit, with headroom (v7x: 64 MiB VMEM)
        ),
    )(query, key, value, w_qkv, b_qkv, w_o, params["bo"],
      params["ln_w"], params["ln_b"])


def reference_mha(query, key, value, params, *, num_heads, causal=False):
    """Pure-JAX f32 reference matching the PyTorch forward (eval mode)."""
    B, S, E = query.shape
    hd = E // num_heads
    scale = hd ** 0.5

    def lin(x, w, b):
        return x @ w.T + b[0]

    q = lin(query, params["wq"], params["bq"]).reshape(B, S, num_heads, hd).transpose(0, 2, 1, 3)
    k = lin(key, params["wk"], params["bk"]).reshape(B, S, num_heads, hd).transpose(0, 2, 1, 3)
    v = lin(value, params["wv"], params["bv"]).reshape(B, S, num_heads, hd).transpose(0, 2, 1, 3)

    scores = jnp.einsum("bhqd,bhkd->bhqk", q, k) / scale
    if causal:
        cm = jnp.tril(jnp.ones((S, S)))[None, None]
        scores = jnp.where(cm == 0, -jnp.inf, scores)
    w = jax.nn.softmax(scores, axis=-1)
    attn = jnp.einsum("bhqk,bhkd->bhqd", w, v).transpose(0, 2, 1, 3).reshape(B, S, E)
    attn = lin(attn, params["wo"], params["bo"])
    res = query + attn
    mean = res.mean(-1, keepdims=True)
    var = ((res - mean) ** 2).mean(-1, keepdims=True)
    return (res - mean) / jnp.sqrt(var + 1e-5) * params["ln_w"][0] + params["ln_b"][0]


def init_params(key, embed_dim):
    ks = jax.random.split(key, 8)
    bound = 1.0 / (embed_dim ** 0.5)

    def w(k):
        return jax.random.uniform(k, (embed_dim, embed_dim), jnp.float32, -bound, bound)

    def b(k):
        return jax.random.uniform(k, (1, embed_dim), jnp.float32, -bound, bound)

    return {
        "wq": w(ks[0]), "bq": b(ks[1]),
        "wk": w(ks[2]), "bk": b(ks[3]),
        "wv": w(ks[4]), "bv": b(ks[5]),
        "wo": w(ks[6]), "bo": b(ks[7]),
        "ln_w": jnp.ones((1, embed_dim), jnp.float32),
        "ln_b": jnp.zeros((1, embed_dim), jnp.float32),
    }


if __name__ == "__main__":
    B, S, E, H = 2, 8, 32, 4
    key = jax.random.PRNGKey(0)
    kq, kk, kv, kp = jax.random.split(key, 4)

    query = jax.random.normal(kq, (B, S, E), jnp.float32)
    key_in = jax.random.normal(kk, (B, S, E), jnp.float32)
    value = jax.random.normal(kv, (B, S, E), jnp.float32)
    params = init_params(kp, E)

    # Non-causal path.
    out = multi_head_attention(query, key_in, value, params, num_heads=H, causal=False)
    out = jax.block_until_ready(out)
    ref = reference_mha(query, key_in, value, params, num_heads=H, causal=False)
    assert out.shape == (B, S, E)
    # bf16 MXU operands -> slightly looser tolerance than a pure-f32 kernel.
    assert jnp.allclose(out, ref, atol=2e-2, rtol=2e-2), float(jnp.max(jnp.abs(out - ref)))

    # Causal path.
    out_c = multi_head_attention(query, key_in, value, params, num_heads=H, causal=True)
    out_c = jax.block_until_ready(out_c)
    ref_c = reference_mha(query, key_in, value, params, num_heads=H, causal=True)
    assert jnp.allclose(out_c, ref_c, atol=2e-2, rtol=2e-2), float(jnp.max(jnp.abs(out_c - ref_c)))

    print("KERNEL_OK")
</pallas_src>

<mosaic_0001>
module attributes {stable_mosaic.version = 11 : i64} {
  func.func @mha_kernel(%arg0: i32, %arg1: memref<1x8x32xf32, #tpu.memory_space<vmem>>, %arg2: memref<1x8x32xf32, #tpu.memory_space<vmem>>, %arg3: memref<1x8x32xf32, #tpu.memory_space<vmem>>, %arg4: memref<3x32x32xbf16, #tpu.memory_space<vmem>>, %arg5: memref<3x1x32xf32, #tpu.memory_space<vmem>>, %arg6: memref<32x32xbf16, #tpu.memory_space<vmem>>, %arg7: memref<1x32xf32, #tpu.memory_space<vmem>>, %arg8: memref<1x32xf32, #tpu.memory_space<vmem>>, %arg9: memref<1x32xf32, #tpu.memory_space<vmem>>, %arg10: memref<1x8x32xf32, #tpu.memory_space<vmem>>, %arg11: memref<8x32xf32, #tpu.memory_space<vmem>>) attributes {dimension_semantics = [#tpu.dimension_semantics<parallel>], iteration_bounds = array<i64: 2>, scalar_prefetch = 0 : i64, scratch_operands = 1 : i64, tpu.core_type = #tpu.core_type<tc>, window_params = [{transform_indices = @transform_0, window_bounds = array<i64: 1, 8, 32>}, {transform_indices = @transform_1, window_bounds = array<i64: 1, 8, 32>}, {transform_indices = @transform_2, window_bounds = array<i64: 1, 8, 32>}, {pipeline_mode = #tpu.pipeline_mode<synchronous>, transform_indices = @transform_3, window_bounds = array<i64: 3, 32, 32>}, {pipeline_mode = #tpu.pipeline_mode<synchronous>, transform_indices = @transform_4, window_bounds = array<i64: 3, 1, 32>}, {pipeline_mode = #tpu.pipeline_mode<synchronous>, transform_indices = @transform_5, window_bounds = array<i64: 32, 32>}, {pipeline_mode = #tpu.pipeline_mode<synchronous>, transform_indices = @transform_6, window_bounds = array<i64: 1, 32>}, {pipeline_mode = #tpu.pipeline_mode<synchronous>, transform_indices = @transform_7, window_bounds = array<i64: 1, 32>}, {pipeline_mode = #tpu.pipeline_mode<synchronous>, transform_indices = @transform_8, window_bounds = array<i64: 1, 32>}, {transform_indices = @transform_9, window_bounds = array<i64: 1, 8, 32>}]} {
    %c0 = arith.constant 0 : index
    %c0_0 = arith.constant 0 : index
    %c0_1 = arith.constant 0 : index
    %0 = vector.load %arg1[%c0, %c0_0, %c0_1] : memref<1x8x32xf32, #tpu.memory_space<vmem>>, vector<1x8x32xf32>
    %1 = vector.shape_cast %0 : vector<1x8x32xf32> to vector<8x32xf32>
    %2 = arith.truncf %1 : vector<8x32xf32> to vector<8x32xbf16>
    %c0_2 = arith.constant 0 : index
    %c0_3 = arith.constant 0 : index
    %c0_4 = arith.constant 0 : index
    %3 = vector.load %arg2[%c0_2, %c0_3, %c0_4] : memref<1x8x32xf32, #tpu.memory_space<vmem>>, vector<1x8x32xf32>
    %4 = vector.shape_cast %3 : vector<1x8x32xf32> to vector<8x32xf32>
    %5 = arith.truncf %4 : vector<8x32xf32> to vector<8x32xbf16>
    %c0_5 = arith.constant 0 : index
    %c0_6 = arith.constant 0 : index
    %c0_7 = arith.constant 0 : index
    %6 = vector.load %arg3[%c0_5, %c0_6, %c0_7] : memref<1x8x32xf32, #tpu.memory_space<vmem>>, vector<1x8x32xf32>
    %7 = vector.shape_cast %6 : vector<1x8x32xf32> to vector<8x32xf32>
    %8 = arith.truncf %7 : vector<8x32xf32> to vector<8x32xbf16>
    %c0_8 = arith.constant 0 : index
    %c0_9 = arith.constant 0 : index
    %c0_10 = arith.constant 0 : index
    %9 = vector.load %arg4[%c0_8, %c0_9, %c0_10] : memref<3x32x32xbf16, #tpu.memory_space<vmem>>, vector<1x32x32xbf16>
    %10 = vector.shape_cast %9 : vector<1x32x32xbf16> to vector<32x32xbf16>
    %cst = arith.constant dense<0.000000e+00> : vector<8x32xf32>
    %11 = tpu.matmul %2, %10, %cst {dimension_numbers = #tpu.dot_dimension_numbers<[1], [0], [0], [1], [0, 0, 1, 1], [], []>} : vector<8x32xbf16>, vector<32x32xbf16>, vector<8x32xf32> -> vector<8x32xf32>
    %c0_11 = arith.constant 0 : index
    %c0_12 = arith.constant 0 : index
    %c0_13 = arith.constant 0 : index
    %12 = vector.load %arg5[%c0_11, %c0_12, %c0_13] : memref<3x1x32xf32, #tpu.memory_space<vmem>>, vector<1x1x32xf32>
    %13 = vector.shape_cast %12 : vector<1x1x32xf32> to vector<1x32xf32>
    %14 = vector.broadcast %13 : vector<1x32xf32> to vector<8x32xf32>
    %15 = arith.addf %11, %14 : vector<8x32xf32>
    %c1 = arith.constant 1 : index
    %c0_14 = arith.constant 0 : index
    %c0_15 = arith.constant 0 : index
    %16 = vector.load %arg4[%c1, %c0_14, %c0_15] : memref<3x32x32xbf16, #tpu.memory_space<vmem>>, vector<1x32x32xbf16>
    %17 = vector.shape_cast %16 : vector<1x32x32xbf16> to vector<32x32xbf16>
    %cst_16 = arith.constant dense<0.000000e+00> : vector<8x32xf32>
    %18 = tpu.matmul %5, %17, %cst_16 {dimension_numbers = #tpu.dot_dimension_numbers<[1], [0], [0], [1], [0, 0, 1, 1], [], []>} : vector<8x32xbf16>, vector<32x32xbf16>, vector<8x32xf32> -> vector<8x32xf32>
    %c1_17 = arith.constant 1 : index
    %c0_18 = arith.constant 0 : index
    %c0_19 = arith.constant 0 : index
    %19 = vector.load %arg5[%c1_17, %c0_18, %c0_19] : memref<3x1x32xf32, #tpu.memory_space<vmem>>, vector<1x1x32xf32>
    %20 = vector.shape_cast %19 : vector<1x1x32xf32> to vector<1x32xf32>
    %21 = vector.broadcast %20 : vector<1x32xf32> to vector<8x32xf32>
    %22 = arith.addf %18, %21 : vector<8x32xf32>
    %c2 = arith.constant 2 : index
    %c0_20 = arith.constant 0 : index
    %c0_21 = arith.constant 0 : index
    %23 = vector.load %arg4[%c2, %c0_20, %c0_21] : memref<3x32x32xbf16, #tpu.memory_space<vmem>>, vector<1x32x32xbf16>
    %24 = vector.shape_cast %23 : vector<1x32x32xbf16> to vector<32x32xbf16>
    %cst_22 = arith.constant dense<0.000000e+00> : vector<8x32xf32>
    %25 = tpu.matmul %8, %24, %cst_22 {dimension_numbers = #tpu.dot_dimension_numbers<[1], [0], [0], [1], [0, 0, 1, 1], [], []>} : vector<8x32xbf16>, vector<32x32xbf16>, vector<8x32xf32> -> vector<8x32xf32>
    %c2_23 = arith.constant 2 : index
    %c0_24 = arith.constant 0 : index
    %c0_25 = arith.constant 0 : index
    %26 = vector.load %arg5[%c2_23, %c0_24, %c0_25] : memref<3x1x32xf32, #tpu.memory_space<vmem>>, vector<1x1x32xf32>
    %27 = vector.shape_cast %26 : vector<1x1x32xf32> to vector<1x32xf32>
    %28 = vector.broadcast %27 : vector<1x32xf32> to vector<8x32xf32>
    %29 = arith.addf %25, %28 : vector<8x32xf32>
    %cst_26 = arith.constant 0.353553385 : f32
    %30 = vector.broadcast %cst_26 : f32 to vector<8x32xf32>
    %31 = arith.mulf %15, %30 : vector<8x32xf32>
    %32 = vector.extract_strided_slice %31 {offsets = [0, 0], sizes = [8, 8], strides = [1, 1]} : vector<8x32xf32> to vector<8x8xf32>
    %33 = arith.truncf %32 : vector<8x8xf32> to vector<8x8xbf16>
    %34 = vector.extract_strided_slice %22 {offsets = [0, 0], sizes = [8, 8], strides = [1, 1]} : vector<8x32xf32> to vector<8x8xf32>
    %35 = arith.truncf %34 : vector<8x8xf32> to vector<8x8xbf16>
    %36 = vector.extract_strided_slice %29 {offsets = [0, 0], sizes = [8, 8], strides = [1, 1]} : vector<8x32xf32> to vector<8x8xf32>
    %37 = arith.truncf %36 : vector<8x8xf32> to vector<8x8xbf16>
    %cst_27 = arith.constant dense<0.000000e+00> : vector<8x8xf32>
    %38 = tpu.matmul %33, %35, %cst_27 {dimension_numbers = #tpu.dot_dimension_numbers<[1], [1], [0], [0], [0, 0, 1, 0], [], []>} : vector<8x8xbf16>, vector<8x8xbf16>, vector<8x8xf32> -> vector<8x8xf32>
    %cst_28 = arith.constant dense<0xFF800000> : vector<8xf32>
    %39 = vector.multi_reduction <maximumf>, %38, %cst_28 [1] : vector<8x8xf32> to vector<8xf32>
    %40 = vector.shape_cast %39 : vector<8xf32> to vector<8x1xf32>
    %41 = vector.broadcast %40 : vector<8x1xf32> to vector<8x8xf32>
    %42 = arith.subf %38, %41 : vector<8x8xf32>
    %43 = math.exp %42 : vector<8x8xf32>
    %cst_29 = arith.constant dense<0.000000e+00> : vector<8xf32>
    %44 = vector.multi_reduction <add>, %43, %cst_29 [1] : vector<8x8xf32> to vector<8xf32>
    %45 = vector.shape_cast %44 : vector<8xf32> to vector<8x1xf32>
    %46 = tpu.reciprocal %45 {approx = true} : vector<8x1xf32> -> vector<8x1xf32>
    %47 = vector.broadcast %46 : vector<8x1xf32> to vector<8x8xf32>
    %48 = arith.mulf %43, %47 : vector<8x8xf32>
    %49 = arith.truncf %48 : vector<8x8xf32> to vector<8x8xbf16>
    %cst_30 = arith.constant dense<0.000000e+00> : vector<8x8xf32>
    %50 = tpu.matmul %49, %37, %cst_30 {dimension_numbers = #tpu.dot_dimension_numbers<[1], [0], [0], [1], [0, 0, 1, 1], [], []>} : vector<8x8xbf16>, vector<8x8xbf16>, vector<8x8xf32> -> vector<8x8xf32>
    %c0_31 = arith.constant 0 : index
    %c0_32 = arith.constant 0 : index
    %51 = vector.load %arg11[%c0_31, %c0_32] : memref<8x32xf32, #tpu.memory_space<vmem>>, vector<8x8xf32>
    tpu.vector_store %arg11[%c0_31, %c0_32], %50 {strides = array<i32>} : memref<8x32xf32, #tpu.memory_space<vmem>>, vector<8x8xf32>,
    %52 = vector.extract_strided_slice %31 {offsets = [0, 8], sizes = [8, 8], strides = [1, 1]} : vector<8x32xf32> to vector<8x8xf32>
    %53 = arith.truncf %52 : vector<8x8xf32> to vector<8x8xbf16>
    %54 = vector.extract_strided_slice %22 {offsets = [0, 8], sizes = [8, 8], strides = [1, 1]} : vector<8x32xf32> to vector<8x8xf32>
    %55 = arith.truncf %54 : vector<8x8xf32> to vector<8x8xbf16>
    %56 = vector.extract_strided_slice %29 {offsets = [0, 8], sizes = [8, 8], strides = [1, 1]} : vector<8x32xf32> to vector<8x8xf32>
    %57 = arith.truncf %56 : vector<8x8xf32> to vector<8x8xbf16>
    %cst_33 = arith.constant dense<0.000000e+00> : vector<8x8xf32>
    %58 = tpu.matmul %53, %55, %cst_33 {dimension_numbers = #tpu.dot_dimension_numbers<[1], [1], [0], [0], [0, 0, 1, 0], [], []>} : vector<8x8xbf16>, vector<8x8xbf16>, vector<8x8xf32> -> vector<8x8xf32>
    %cst_34 = arith.constant dense<0xFF800000> : vector<8xf32>
    %59 = vector.multi_reduction <maximumf>, %58, %cst_34 [1] : vector<8x8xf32> to vector<8xf32>
    %60 = vector.shape_cast %59 : vector<8xf32> to vector<8x1xf32>
    %61 = vector.broadcast %60 : vector<8x1xf32> to vector<8x8xf32>
    %62 = arith.subf %58, %61 : vector<8x8xf32>
    %63 = math.exp %62 : vector<8x8xf32>
    %cst_35 = arith.constant dense<0.000000e+00> : vector<8xf32>
    %64 = vector.multi_reduction <add>, %63, %cst_35 [1] : vector<8x8xf32> to vector<8xf32>
    %65 = vector.shape_cast %64 : vector<8xf32> to vector<8x1xf32>
    %66 = tpu.reciprocal %65 {approx = true} : vector<8x1xf32> -> vector<8x1xf32>
    %67 = vector.broadcast %66 : vector<8x1xf32> to vector<8x8xf32>
    %68 = arith.mulf %63, %67 : vector<8x8xf32>
    %69 = arith.truncf %68 : vector<8x8xf32> to vector<8x8xbf16>
    %cst_36 = arith.constant dense<0.000000e+00> : vector<8x8xf32>
    %70 = tpu.matmul %69, %57, %cst_36 {dimension_numbers = #tpu.dot_dimension_numbers<[1], [0], [0], [1], [0, 0, 1, 1], [], []>} : vector<8x8xbf16>, vector<8x8xbf16>, vector<8x8xf32> -> vector<8x8xf32>
    %c0_37 = arith.constant 0 : index
    %c8 = arith.constant 8 : index
    %71 = vector.load %arg11[%c0_37, %c8] : memref<8x32xf32, #tpu.memory_space<vmem>>, vector<8x8xf32>
    tpu.vector_store %arg11[%c0_37, %c8], %70 {strides = array<i32>} : memref<8x32xf32, #tpu.memory_space<vmem>>, vector<8x8xf32>,
    %72 = vector.extract_strided_slice %31 {offsets = [0, 16], sizes = [8, 8], strides = [1, 1]} : vector<8x32xf32> to vector<8x8xf32>
    %73 = arith.truncf %72 : vector<8x8xf32> to vector<8x8xbf16>
    %74 = vector.extract_strided_slice %22 {offsets = [0, 16], sizes = [8, 8], strides = [1, 1]} : vector<8x32xf32> to vector<8x8xf32>
    %75 = arith.truncf %74 : vector<8x8xf32> to vector<8x8xbf16>
    %76 = vector.extract_strided_slice %29 {offsets = [0, 16], sizes = [8, 8], strides = [1, 1]} : vector<8x32xf32> to vector<8x8xf32>
    %77 = arith.truncf %76 : vector<8x8xf32> to vector<8x8xbf16>
    %cst_38 = arith.constant dense<0.000000e+00> : vector<8x8xf32>
    %78 = tpu.matmul %73, %75, %cst_38 {dimension_numbers = #tpu.dot_dimension_numbers<[1], [1], [0], [0], [0, 0, 1, 0], [], []>} : vector<8x8xbf16>, vector<8x8xbf16>, vector<8x8xf32> -> vector<8x8xf32>
    %cst_39 = arith.constant dense<0xFF800000> : vector<8xf32>
    %79 = vector.multi_reduction <maximumf>, %78, %cst_39 [1] : vector<8x8xf32> to vector<8xf32>
    %80 = vector.shape_cast %79 : vector<8xf32> to vector<8x1xf32>
    %81 = vector.broadcast %80 : vector<8x1xf32> to vector<8x8xf32>
    %82 = arith.subf %78, %81 : vector<8x8xf32>
    %83 = math.exp %82 : vector<8x8xf32>
    %cst_40 = arith.constant dense<0.000000e+00> : vector<8xf32>
    %84 = vector.multi_reduction <add>, %83, %cst_40 [1] : vector<8x8xf32> to vector<8xf32>
    %85 = vector.shape_cast %84 : vector<8xf32> to vector<8x1xf32>
    %86 = tpu.reciprocal %85 {approx = true} : vector<8x1xf32> -> vector<8x1xf32>
    %87 = vector.broadcast %86 : vector<8x1xf32> to vector<8x8xf32>
    %88 = arith.mulf %83, %87 : vector<8x8xf32>
    %89 = arith.truncf %88 : vector<8x8xf32> to vector<8x8xbf16>
    %cst_41 = arith.constant dense<0.000000e+00> : vector<8x8xf32>
    %90 = tpu.matmul %89, %77, %cst_41 {dimension_numbers = #tpu.dot_dimension_numbers<[1], [0], [0], [1], [0, 0, 1, 1], [], []>} : vector<8x8xbf16>, vector<8x8xbf16>, vector<8x8xf32> -> vector<8x8xf32>
    %c0_42 = arith.constant 0 : index
    %c16 = arith.constant 16 : index
    %91 = vector.load %arg11[%c0_42, %c16] : memref<8x32xf32, #tpu.memory_space<vmem>>, vector<8x8xf32>
    tpu.vector_store %arg11[%c0_42, %c16], %90 {strides = array<i32>} : memref<8x32xf32, #tpu.memory_space<vmem>>, vector<8x8xf32>,
    %92 = vector.extract_strided_slice %31 {offsets = [0, 24], sizes = [8, 8], strides = [1, 1]} : vector<8x32xf32> to vector<8x8xf32>
    %93 = arith.truncf %92 : vector<8x8xf32> to vector<8x8xbf16>
    %94 = vector.extract_strided_slice %22 {offsets = [0, 24], sizes = [8, 8], strides = [1, 1]} : vector<8x32xf32> to vector<8x8xf32>
    %95 = arith.truncf %94 : vector<8x8xf32> to vector<8x8xbf16>
    %96 = vector.extract_strided_slice %29 {offsets = [0, 24], sizes = [8, 8], strides = [1, 1]} : vector<8x32xf32> to vector<8x8xf32>
    %97 = arith.truncf %96 : vector<8x8xf32> to vector<8x8xbf16>
    %cst_43 = arith.constant dense<0.000000e+00> : vector<8x8xf32>
    %98 = tpu.matmul %93, %95, %cst_43 {dimension_numbers = #tpu.dot_dimension_numbers<[1], [1], [0], [0], [0, 0, 1, 0], [], []>} : vector<8x8xbf16>, vector<8x8xbf16>, vector<8x8xf32> -> vector<8x8xf32>
    %cst_44 = arith.constant dense<0xFF800000> : vector<8xf32>
    %99 = vector.multi_reduction <maximumf>, %98, %cst_44 [1] : vector<8x8xf32> to vector<8xf32>
    %100 = vector.shape_cast %99 : vector<8xf32> to vector<8x1xf32>
    %101 = vector.broadcast %100 : vector<8x1xf32> to vector<8x8xf32>
    %102 = arith.subf %98, %101 : vector<8x8xf32>
    %103 = math.exp %102 : vector<8x8xf32>
    %cst_45 = arith.constant dense<0.000000e+00> : vector<8xf32>
    %104 = vector.multi_reduction <add>, %103, %cst_45 [1] : vector<8x8xf32> to vector<8xf32>
    %105 = vector.shape_cast %104 : vector<8xf32> to vector<8x1xf32>
    %106 = tpu.reciprocal %105 {approx = true} : vector<8x1xf32> -> vector<8x1xf32>
    %107 = vector.broadcast %106 : vector<8x1xf32> to vector<8x8xf32>
    %108 = arith.mulf %103, %107 : vector<8x8xf32>
    %109 = arith.truncf %108 : vector<8x8xf32> to vector<8x8xbf16>
    %cst_46 = arith.constant dense<0.000000e+00> : vector<8x8xf32>
    %110 = tpu.matmul %109, %97, %cst_46 {dimension_numbers = #tpu.dot_dimension_numbers<[1], [0], [0], [1], [0, 0, 1, 1], [], []>} : vector<8x8xbf16>, vector<8x8xbf16>, vector<8x8xf32> -> vector<8x8xf32>
    %c0_47 = arith.constant 0 : index
    %c24 = arith.constant 24 : index
    %111 = vector.load %arg11[%c0_47, %c24] : memref<8x32xf32, #tpu.memory_space<vmem>>, vector<8x8xf32>
    tpu.vector_store %arg11[%c0_47, %c24], %110 {strides = array<i32>} : memref<8x32xf32, #tpu.memory_space<vmem>>, vector<8x8xf32>,
    %c0_48 = arith.constant 0 : index
    %c0_49 = arith.constant 0 : index
    %112 = vector.load %arg11[%c0_48, %c0_49] : memref<8x32xf32, #tpu.memory_space<vmem>>, vector<8x32xf32>
    %113 = arith.truncf %112 : vector<8x32xf32> to vector<8x32xbf16>
    %c0_50 = arith.constant 0 : index
    %c0_51 = arith.constant 0 : index
    %114 = vector.load %arg6[%c0_50, %c0_51] : memref<32x32xbf16, #tpu.memory_space<vmem>>, vector<32x32xbf16>
    %cst_52 = arith.constant dense<0.000000e+00> : vector<8x32xf32>
    %115 = tpu.matmul %113, %114, %cst_52 {dimension_numbers = #tpu.dot_dimension_numbers<[1], [0], [0], [1], [0, 0, 1, 1], [], []>} : vector<8x32xbf16>, vector<32x32xbf16>, vector<8x32xf32> -> vector<8x32xf32>
    %c0_53 = arith.constant 0 : index
    %c0_54 = arith.constant 0 : index
    %116 = vector.load %arg7[%c0_53, %c0_54] : memref<1x32xf32, #tpu.memory_space<vmem>>, vector<1x32xf32>
    %117 = vector.broadcast %116 : vector<1x32xf32> to vector<8x32xf32>
    %118 = arith.addf %115, %117 : vector<8x32xf32>
    %119 = arith.addf %1, %118 : vector<8x32xf32>
    %cst_55 = arith.constant dense<0.000000e+00> : vector<8xf32>
    %120 = vector.multi_reduction <add>, %119, %cst_55 [1] : vector<8x32xf32> to vector<8xf32>
    %121 = vector.shape_cast %120 : vector<8xf32> to vector<8x1xf32>
    %cst_56 = arith.constant 3.200000e+01 : f32
    %122 = vector.broadcast %cst_56 : f32 to vector<8x1xf32>
    %123 = arith.divf %121, %122 : vector<8x1xf32>
    %124 = vector.broadcast %123 : vector<8x1xf32> to vector<8x32xf32>
    %125 = arith.subf %119, %124 : vector<8x32xf32>
    %126 = arith.mulf %125, %125 : vector<8x32xf32>
    %cst_57 = arith.constant dense<0.000000e+00> : vector<8xf32>
    %127 = vector.multi_reduction <add>, %126, %cst_57 [1] : vector<8x32xf32> to vector<8xf32>
    %128 = vector.shape_cast %127 : vector<8xf32> to vector<8x1xf32>
    %cst_58 = arith.constant 3.200000e+01 : f32
    %129 = vector.broadcast %cst_58 : f32 to vector<8x1xf32>
    %130 = arith.divf %128, %129 : vector<8x1xf32>
    %131 = vector.broadcast %123 : vector<8x1xf32> to vector<8x32xf32>
    %132 = arith.subf %119, %131 : vector<8x32xf32>
    %cst_59 = arith.constant 9.99999974E-6 : f32
    %133 = vector.broadcast %cst_59 : f32 to vector<8x1xf32>
    %134 = arith.addf %130, %133 : vector<8x1xf32>
    %135 = math.rsqrt %134 : vector<8x1xf32>
    %136 = vector.broadcast %135 : vector<8x1xf32> to vector<8x32xf32>
    %137 = arith.mulf %132, %136 : vector<8x32xf32>
    %c0_60 = arith.constant 0 : index
    %c0_61 = arith.constant 0 : index
    %138 = vector.load %arg8[%c0_60, %c0_61] : memref<1x32xf32, #tpu.memory_space<vmem>>, vector<1x32xf32>
    %139 = vector.broadcast %138 : vector<1x32xf32> to vector<8x32xf32>
    %140 = arith.mulf %137, %139 : vector<8x32xf32>
    %c0_62 = arith.constant 0 : index
    %c0_63 = arith.constant 0 : index
    %141 = vector.load %arg9[%c0_62, %c0_63] : memref<1x32xf32, #tpu.memory_space<vmem>>, vector<1x32xf32>
    %142 = vector.broadcast %141 : vector<1x32xf32> to vector<8x32xf32>
    %143 = arith.addf %140, %142 : vector<8x32xf32>
    %c0_64 = arith.constant 0 : index
    %c0_65 = arith.constant 0 : index
    %c0_66 = arith.constant 0 : index
    %144 = vector.load %arg10[%c0_64, %c0_65, %c0_66] : memref<1x8x32xf32, #tpu.memory_space<vmem>>, vector<1x8x32xf32>
    %145 = vector.shape_cast %144 : vector<1x8x32xf32> to vector<8x32xf32>
    %146 = vector.shape_cast %143 : vector<8x32xf32> to vector<1x8x32xf32>
    tpu.vector_store %arg10[%c0_64, %c0_65, %c0_66], %146 {strides = array<i32>} : memref<1x8x32xf32, #tpu.memory_space<vmem>>, vector<1x8x32xf32>,
    return
  }
  func.func @transform_0(%arg0: i32) -> (i32, i32, i32) {
    %c0_i32 = arith.constant 0 : i32
    %c0_i32_0 = arith.constant 0 : i32
    %c0_i32_1 = arith.constant 0 : i32
    return %arg0, %c0_i32, %c0_i32_0 : i32, i32, i32
  }
  func.func @transform_1(%arg0: i32) -> (i32, i32, i32) {
    %c0_i32 = arith.constant 0 : i32
    %c0_i32_0 = arith.constant 0 : i32
    %c0_i32_1 = arith.constant 0 : i32
    return %arg0, %c0_i32, %c0_i32_0 : i32, i32, i32
  }
  func.func @transform_2(%arg0: i32) -> (i32, i32, i32) {
    %c0_i32 = arith.constant 0 : i32
    %c0_i32_0 = arith.constant 0 : i32
    %c0_i32_1 = arith.constant 0 : i32
    return %arg0, %c0_i32, %c0_i32_0 : i32, i32, i32
  }
  func.func @transform_3(%arg0: i32) -> (i32, i32, i32) {
    %c0_i32 = arith.constant 0 : i32
    %c0_i32_0 = arith.constant 0 : i32
    %c0_i32_1 = arith.constant 0 : i32
    %c0_i32_2 = arith.constant 0 : i32
    return %c0_i32, %c0_i32_0, %c0_i32_1 : i32, i32, i32
  }
  func.func @transform_4(%arg0: i32) -> (i32, i32, i32) {
    %c0_i32 = arith.constant 0 : i32
    %c0_i32_0 = arith.constant 0 : i32
    %c0_i32_1 = arith.constant 0 : i32
    %c0_i32_2 = arith.constant 0 : i32
    return %c0_i32, %c0_i32_0, %c0_i32_1 : i32, i32, i32
  }
  func.func @transform_5(%arg0: i32) -> (i32, i32) {
    %c0_i32 = arith.constant 0 : i32
    %c0_i32_0 = arith.constant 0 : i32
    %c0_i32_1 = arith.constant 0 : i32
    return %c0_i32, %c0_i32_0 : i32, i32
  }
  func.func @transform_6(%arg0: i32) -> (i32, i32) {
    %c0_i32 = arith.constant 0 : i32
    %c0_i32_0 = arith.constant 0 : i32
    %c0_i32_1 = arith.constant 0 : i32
    return %c0_i32, %c0_i32_0 : i32, i32
  }
  func.func @transform_7(%arg0: i32) -> (i32, i32) {
    %c0_i32 = arith.constant 0 : i32
    %c0_i32_0 = arith.constant 0 : i32
    %c0_i32_1 = arith.constant 0 : i32
    return %c0_i32, %c0_i32_0 : i32, i32
  }
  func.func @transform_8(%arg0: i32) -> (i32, i32) {
    %c0_i32 = arith.constant 0 : i32
    %c0_i32_0 = arith.constant 0 : i32
    %c0_i32_1 = arith.constant 0 : i32
    return %c0_i32, %c0_i32_0 : i32, i32
  }
  func.func @transform_9(%arg0: i32) -> (i32, i32, i32) {
    %c0_i32 = arith.constant 0 : i32
    %c0_i32_0 = arith.constant 0 : i32
    %c0_i32_1 = arith.constant 0 : i32
    return %arg0, %c0_i32, %c0_i32_0 : i32, i32, i32
  }
}

</mosaic_0001>

<llo_original>
// kernel: tpu_custom_call.1
$region0: #{tpu_custom_call.1}
  #allocation0 [shape = 'u32[]', space=smem, size = 0x4, offset = 0x4, fixed_abs, tag = 'smem constant byte address 0x4 - core index']
  #allocation1 [shape = 'u32[72,128]{1,0:T(1,128)}', space=vmem, size = 0x9000, scoped, tag = 'internal scratch']
  #allocation2 [shape = 'f32[8,32]{1,0:T(8,128)}', space=vmem, size = 0x1000, scoped, tag = 'scratch operand']
  %s0 = inlined_call_operand.hbm [shape: f32[2,8,32], index: 0, kind: input, shape index: {}]
  %s1 = inlined_call_operand.hbm [shape: f32[2,8,32], index: 1, kind: input, shape index: {}]
  %s2 = inlined_call_operand.hbm [shape: f32[2,8,32], index: 2, kind: input, shape index: {}]
  %s3 = inlined_call_operand.hbm [shape: bf16[3,32,32], index: 3, kind: input, shape index: {}]
  %s4 = inlined_call_operand.vmem [shape: f32[3,1,32], index: 4, kind: input, shape index: {}]
  %s5 = inlined_call_operand.hbm [shape: bf16[32,32], index: 5, kind: input, shape index: {}]
  %s6 = inlined_call_operand.vmem [shape: f32[1,32], index: 6, kind: input, shape index: {}]
  %s7 = inlined_call_operand.vmem [shape: f32[1,32], index: 7, kind: input, shape index: {}]
  %s8 = inlined_call_operand.vmem [shape: f32[1,32], index: 8, kind: input, shape index: {}]
  %s9 = inlined_call_operand.hbm [shape: f32[2,8,32], index: 9, kind: output, shape index: {}]
  %s10 = sld [smem:[#allocation0]]
  $region89: #{tpu_custom_call.1} parent=0
    _
  %s12 = ssub.s32 1, %s10
  %s13 = scalar_select 0, %s12, %s10
  $region1: #{tpu_custom_call.1} parent=0
    #allocation3 [shape = 'u8[8192]{0}', space=vmem, size = 0x2000, scoped, tag = 'input window, operand 0']
    #allocation4 [shape = 's32[2]{0}', space=sflag, size = 0x8, scoped, tag = 'scoped memory for tpu_custom_call.1']
    #allocation5 [shape = 's32[2]{0}', space=sflag, size = 0x8, scoped, tag = 'scoped memory for tpu_custom_call.1']
    #allocation6 [shape = 'u8[8192]{0}', space=vmem, size = 0x2000, scoped, tag = 'input window, operand 1']
    #allocation7 [shape = 's32[2]{0}', space=sflag, size = 0x8, scoped, tag = 'scoped memory for tpu_custom_call.1']
    #allocation8 [shape = 'u8[8192]{0}', space=vmem, size = 0x2000, scoped, tag = 'input window, operand 2']
    #allocation9 [shape = 'u8[24576]{0}', space=vmem, size = 0x6000, scoped, tag = 'input window, operand 3, single buffered']
    #allocation10 [shape = 's32[1]{0}', space=sflag, size = 0x4, scoped, tag = 'scoped memory for tpu_custom_call.1']
    #allocation11 [shape = 'u8[8192]{0}', space=vmem, size = 0x2000, scoped, tag = 'input window, operand 5, single buffered']
    #allocation12 [shape = 'u8[8192]{0}', space=vmem, size = 0x2000, scoped, tag = 'output window, operand 0']
    %14 = vsyncpa [#allocation4], 0
    %s15 = scalar_lea.sflag [#allocation4], 1
    %16 = vsyncpa %s15, 0
    %17 = vsyncpa [#allocation7], 0
    %s18 = scalar_lea.sflag [#allocation7], 1
    %19 = vsyncpa %s18, 0
    %20 = vsyncpa [#allocation10], 0
    %21 = vsyncpa [#allocation5], 0
    %s22 = scalar_lea.sflag [#allocation5], 1
    %23 = vsyncpa %s22, 0
    loop: start=0, step=1, limit=4
    $region2: #{tpu_custom_call.1} parent=1 // loop_pre_header
      _
    $region3: #{tpu_custom_call.1} parent=1 // loop_header
      %s25 = sphi 0, %s29
      %p26 = scmp.ge.s32.totalorder %s25, 4
      %s35 = sphi 0, %s37
      %s38 = sphi 0, %s35
      %s39 = sphi 0, %s38
      %s55 = sphi 0, %s39
      %s61 = sphi 0, %s63
      %s64 = sphi 0, %s61
      %s65 = sphi 0, %s64
      %s81 = sphi 0, %s65
      %s87 = sphi 0, %s89
      %s90 = sphi 0, %s87
      %s91 = sphi 0, %s90
      %s107 = sphi 0, %s91
      %s111 = sphi 0, %s111
      %s113 = sphi 0, %s111
      %s114 = sphi 0, %s113
      %s128 = sphi 0, %s114
      %s132 = sphi 0, %s132
      %s134 = sphi 0, %s132
      %s135 = sphi 0, %s134
      %s149 = sphi 0, %s135
      %s153 = sphi 0, %s153
      %s155 = sphi 0, %s153
      %s156 = sphi 0, %s155
      %s170 = sphi 0, %s156
      %s174 = sphi 0, %s174
      %s176 = sphi 0, %s174
      %s177 = sphi 0, %s176
      %s191 = sphi 0, %s177
      %s195 = sphi 0, %s195
      %s197 = sphi 0, %s195
      %s198 = sphi 0, %s197
      %s212 = sphi 0, %s198
      %s216 = sphi 0, %s216
      %s218 = sphi 0, %s216
      %s219 = sphi 0, %s218
      %s233 = sphi 0, %s219
      %s239 = sphi 0, %s241
      %s242 = sphi 0, %s239
      %s243 = sphi 0, %s242
      %s259 = sphi 0, %s243
    $region4: #{tpu_custom_call.1} parent=1 // loop_header_branch
      %28 = sbr.rel (%p26) target = $region8
    $region5: #{tpu_custom_call.1} parent=1 // loop_body
      %s30 = ssub.s32 %s25, 1
      %s31 = ssub.s32 %s25, 2
      %s32 = sadd.s32 %s25, 1
      %s33 = ssub.s32 %s25, %s32
      %p34 = scmp.eq.s32.totalorder %s33, 0
      %s36 = sadd.s32 %s35, 1
      %s37 = scalar_select %p34, %s35, %s36
      %p40 = pneg %p34
      %p41 = scmp.eq.s32.totalorder %s25, 1
      %p42 = por %p40, %p41
      %p43 = scmp.ne.s32.totalorder %s35, %s38
      %p44 = scmp.eq.s32.totalorder %s25, 0
      %p45 = por %p43, %p44
      %p46 = scmp.ne.s32.totalorder %s35, %s38
      %p47 = scmp.eq.s32.totalorder %s30, 1
      %p48 = por %p46, %p47
      %p49 = scmp.ne.s32.totalorder %s38, %s39
      %p50 = scmp.eq.s32.totalorder %s30, 0
      %p51 = por %p49, %p50
      %p52 = scmp.ne.s32.totalorder %s38, %s39
      %p53 = scmp.eq.s32.totalorder %s31, 1
      %p54 = por %p52, %p53
      %p56 = scmp.ne.s32.totalorder %s39, %s55
      %p57 = scmp.eq.s32.totalorder %s31, 0
      %p58 = por %p56, %p57
      %s59 = ssub.s32 %s25, %s32
      %p60 = scmp.eq.s32.totalorder %s59, 0
      %s62 = sadd.s32 %s61, 1
      %s63 = scalar_select %p60, %s61, %s62
      %p66 = pneg %p60
      %p67 = scmp.eq.s32.totalorder %s25, 1
      %p68 = por %p66, %p67
      %p69 = scmp.ne.s32.totalorder %s61, %s64
      %p70 = scmp.eq.s32.totalorder %s25, 0
      %p71 = por %p69, %p70
      %p72 = scmp.ne.s32.totalorder %s61, %s64
      %p73 = scmp.eq.s32.totalorder %s30, 1
      %p74 = por %p72, %p73
      %p75 = scmp.ne.s32.totalorder %s64, %s65
      %p76 = scmp.eq.s32.totalorder %s30, 0
      %p77 = por %p75, %p76
      %p78 = scmp.ne.s32.totalorder %s64, %s65
      %p79 = scmp.eq.s32.totalorder %s31, 1
      %p80 = por %p78, %p79
      %p82 = scmp.ne.s32.totalorder %s65, %s81
      %p83 = scmp.eq.s32.totalorder %s31, 0
      %p84 = por %p82, %p83
      %s85 = ssub.s32 %s25, %s32
      %p86 = scmp.eq.s32.totalorder %s85, 0
      %s88 = sadd.s32 %s87, 1
      %s89 = scalar_select %p86, %s87, %s88
      %p92 = pneg %p86
      %p93 = scmp.eq.s32.totalorder %s25, 1
      %p94 = por %p92, %p93
      %p95 = scmp.ne.s32.totalorder %s87, %s90
      %p96 = scmp.eq.s32.totalorder %s25, 0
      %p97 = por %p95, %p96
      %p98 = scmp.ne.s32.totalorder %s87, %s90
      %p99 = scmp.eq.s32.totalorder %s30, 1
      %p100 = por %p98, %p99
      %p101 = scmp.ne.s32.totalorder %s90, %s91
      %p102 = scmp.eq.s32.totalorder %s30, 0
      %p103 = por %p101, %p102
      %p104 = scmp.ne.s32.totalorder %s90, %s91
      %p105 = scmp.eq.s32.totalorder %s31, 1
      %p106 = por %p104, %p105
      %p108 = scmp.ne.s32.totalorder %s91, %s107
      %p109 = scmp.eq.s32.totalorder %s31, 0
      %p110 = por %p108, %p109
      %s112 = sadd.s32 %s111, 1
      %p115 = scmp.eq.s32.totalorder %s25, 1
      %p116 = scmp.ne.s32.totalorder %s111, %s113
      %p117 = scmp.eq.s32.totalorder %s25, 0
      %p118 = por %p116, %p117
      %p119 = scmp.ne.s32.totalorder %s111, %s113
      %p120 = scmp.eq.s32.totalorder %s30, 1
      %p121 = por %p119, %p120
      %p122 = scmp.ne.s32.totalorder %s113, %s114
      %p123 = scmp.eq.s32.totalorder %s30, 0
      %p124 = por %p122, %p123
      %p125 = scmp.ne.s32.totalorder %s113, %s114
      %p126 = scmp.eq.s32.totalorder %s31, 1
      %p127 = por %p125, %p126
      %p129 = scmp.ne.s32.totalorder %s114, %s128
      %p130 = scmp.eq.s32.totalorder %s31, 0
      %p131 = por %p129, %p130
      %s133 = sadd.s32 %s132, 1
      %p136 = scmp.eq.s32.totalorder %s25, 1
      %p137 = scmp.ne.s32.totalorder %s132, %s134
      %p138 = scmp.eq.s32.totalorder %s25, 0
      %p139 = por %p137, %p138
      %p140 = scmp.ne.s32.totalorder %s132, %s134
      %p141 = scmp.eq.s32.totalorder %s30, 1
      %p142 = por %p140, %p141
      %p143 = scmp.ne.s32.totalorder %s134, %s135
      %p144 = scmp.eq.s32.totalorder %s30, 0
      %p145 = por %p143, %p144
      %p146 = scmp.ne.s32.totalorder %s134, %s135
      %p147 = scmp.eq.s32.totalorder %s31, 1
      %p148 = por %p146, %p147
      %p150 = scmp.ne.s32.totalorder %s135, %s149
      %p151 = scmp.eq.s32.totalorder %s31, 0
      %p152 = por %p150, %p151
      %s154 = sadd.s32 %s153, 1
      %p157 = scmp.eq.s32.totalorder %s25, 1
      %p158 = scmp.ne.s32.totalorder %s153, %s155
      %p159 = scmp.eq.s32.totalorder %s25, 0
      %p160 = por %p158, %p159
      %p161 = scmp.ne.s32.totalorder %s153, %s155
      %p162 = scmp.eq.s32.totalorder %s30, 1
      %p163 = por %p161, %p162
      %p164 = scmp.ne.s32.totalorder %s155, %s156
      %p165 = scmp.eq.s32.totalorder %s30, 0
      %p166 = por %p164, %p165
      %p167 = scmp.ne.s32.totalorder %s155, %s156
      %p168 = scmp.eq.s32.totalorder %s31, 1
      %p169 = por %p167, %p168
      %p171 = scmp.ne.s32.totalorder %s156, %s170
      %p172 = scmp.eq.s32.totalorder %s31, 0
      %p173 = por %p171, %p172
      %s175 = sadd.s32 %s174, 1
      %p178 = scmp.eq.s32.totalorder %s25, 1
      %p179 = scmp.ne.s32.totalorder %s174, %s176
      %p180 = scmp.eq.s32.totalorder %s25, 0
      %p181 = por %p179, %p180
      %p182 = scmp.ne.s32.totalorder %s174, %s176
      %p183 = scmp.eq.s32.totalorder %s30, 1
      %p184 = por %p182, %p183
      %p185 = scmp.ne.s32.totalorder %s176, %s177
      %p186 = scmp.eq.s32.totalorder %s30, 0
      %p187 = por %p185, %p186
      %p188 = scmp.ne.s32.totalorder %s176, %s177
      %p189 = scmp.eq.s32.totalorder %s31, 1
      %p190 = por %p188, %p189
      %p192 = scmp.ne.s32.totalorder %s177, %s191
      %p193 = scmp.eq.s32.totalorder %s31, 0
      %p194 = por %p192, %p193
      %s196 = sadd.s32 %s195, 1
      %p199 = scmp.eq.s32.totalorder %s25, 1
      %p200 = scmp.ne.s32.totalorder %s195, %s197
      %p201 = scmp.eq.s32.totalorder %s25, 0
      %p202 = por %p200, %p201
      %p203 = scmp.ne.s32.totalorder %s195, %s197
      %p204 = scmp.eq.s32.totalorder %s30, 1
      %p205 = por %p203, %p204
      %p206 = scmp.ne.s32.totalorder %s197, %s198
      %p207 = scmp.eq.s32.totalorder %s30, 0
      %p208 = por %p206, %p207
      %p209 = scmp.ne.s32.totalorder %s197, %s198
      %p210 = scmp.eq.s32.totalorder %s31, 1
      %p211 = por %p209, %p210
      %p213 = scmp.ne.s32.totalorder %s198, %s212
      %p214 = scmp.eq.s32.totalorder %s31, 0
      %p215 = por %p213, %p214
      %s217 = sadd.s32 %s216, 1
      %p220 = scmp.eq.s32.totalorder %s25, 1
      %p221 = scmp.ne.s32.totalorder %s216, %s218
      %p222 = scmp.eq.s32.totalorder %s25, 0
      %p223 = por %p221, %p222
      %p224 = scmp.ne.s32.totalorder %s216, %s218
      %p225 = scmp.eq.s32.totalorder %s30, 1
      %p226 = por %p224, %p225
      %p227 = scmp.ne.s32.totalorder %s218, %s219
      %p228 = scmp.eq.s32.totalorder %s30, 0
      %p229 = por %p227, %p228
      %p230 = scmp.ne.s32.totalorder %s218, %s219
      %p231 = scmp.eq.s32.totalorder %s31, 1
      %p232 = por %p230, %p231
      %p234 = scmp.ne.s32.totalorder %s219, %s233
      %p235 = scmp.eq.s32.totalorder %s31, 0
      %p236 = por %p234, %p235
      %s237 = ssub.s32 %s25, %s32
      %p238 = scmp.eq.s32.totalorder %s237, 0
      %s240 = sadd.s32 %s239, 1
      %s241 = scalar_select %p238, %s239, %s240
      %p244 = pneg %p238
      %p245 = scmp.eq.s32.totalorder %s25, 1
      %p246 = por %p244, %p245
      %p247 = scmp.ne.s32.totalorder %s239, %s242
      %p248 = scmp.eq.s32.totalorder %s25, 0
      %p249 = por %p247, %p248
      %p250 = scmp.ne.s32.totalorder %s239, %s242
      %p251 = scmp.eq.s32.totalorder %s30, 1
      %p252 = por %p250, %p251
      %p253 = scmp.ne.s32.totalorder %s242, %s243
      %p254 = scmp.eq.s32.totalorder %s30, 0
      %p255 = por %p253, %p254
      %p256 = scmp.ne.s32.totalorder %s242, %s243
      %p257 = scmp.eq.s32.totalorder %s31, 1
      %p258 = por %p256, %p257
      %p260 = scmp.ne.s32.totalorder %s243, %s259
      %p261 = scmp.eq.s32.totalorder %s31, 0
      %p262 = por %p260, %p261
      %p263 = scmp.le.s32.totalorder 1, %s25
      %p264 = scmp.lt.s32.totalorder %s25, 3
      %p265 = pnand %p263, %p264
      %p266 = pneg %p265
      // Predicated region
      $region9: #{tpu_custom_call.1} parent=5 // pred_check
        _
      $region10: #{tpu_custom_call.1} parent=5 // pred_check_branch
        %268 = sbr.rel (%p265) target = $region12
      $region11: #{tpu_custom_call.1} parent=5 // pred_region
        %s269 = ssub.s32 %s25, 1
        // Predicated region
        $region13: #{tpu_custom_call.1} parent=11 // pred_check
          %p270 = pneg %p124
        $region14: #{tpu_custom_call.1} parent=11 // pred_check_branch
          %272 = sbr.rel (%p270) target = $region16
        $region15: #{tpu_custom_call.1} parent=11 // pred_region
          %274 = vsyncadd [#allocation10], 0
          %s275 = sshll.u32 %s3, 4
          %s276 = int_to_ptr.hbm [resolvable:$true] %s275
          %s277 = sshll.u32 [#allocation9], 4
          %s278 = int_to_ptr.vmem [resolvable:$true] %s277
          %283 = dma.hbm_to_vmem [thread:$0]  %s276, 768, %s278, [#allocation10], 64, 64, 4
        $region16: #{tpu_custom_call.1} parent=11 // pred_fallthru
          _
        // Predicated region
        $region17: #{tpu_custom_call.1} parent=11 // pred_check
          %p284 = pneg %p145
        $region18: #{tpu_custom_call.1} parent=11 // pred_check_branch
          %286 = sbr.rel (%p284) target = $region20
        $region19: #{tpu_custom_call.1} parent=11 // pred_region
          _
        $region20: #{tpu_custom_call.1} parent=11 // pred_fallthru
          _
        // Predicated region
        $region21: #{tpu_custom_call.1} parent=11 // pred_check
          %p287 = pneg %p166
        $region22: #{tpu_custom_call.1} parent=11 // pred_check_branch
          %289 = sbr.rel (%p287) target = $region24
        $region23: #{tpu_custom_call.1} parent=11 // pred_region
          %291 = vsyncadd [#allocation10], 0
          %s292 = sshll.u32 %s5, 4
          %s293 = int_to_ptr.hbm [resolvable:$true] %s292
          %s294 = sshll.u32 [#allocation11], 4
          %s295 = int_to_ptr.vmem [resolvable:$true] %s294
          %300 = dma.hbm_to_vmem [thread:$0]  %s293, 256, %s295, [#allocation10], 64, 64, 4
        $region24: #{tpu_custom_call.1} parent=11 // pred_fallthru
          _
        // Predicated region
        $region25: #{tpu_custom_call.1} parent=11 // pred_check
          %p301 = pneg %p187
        $region26: #{tpu_custom_call.1} parent=11 // pred_check_branch
          %303 = sbr.rel (%p301) target = $region28
        $region27: #{tpu_custom_call.1} parent=11 // pred_region
          _
        $region28: #{tpu_custom_call.1} parent=11 // pred_fallthru
          _
        // Predicated region
        $region29: #{tpu_custom_call.1} parent=11 // pred_check
          %p304 = pneg %p208
        $region30: #{tpu_custom_call.1} parent=11 // pred_check_branch
          %306 = sbr.rel (%p304) target = $region32
        $region31: #{tpu_custom_call.1} parent=11 // pred_region
          _
        $region32: #{tpu_custom_call.1} parent=11 // pred_fallthru
          _
        // Predicated region
        $region33: #{tpu_custom_call.1} parent=11 // pred_check
          %p307 = pneg %p229
        $region34: #{tpu_custom_call.1} parent=11 // pred_check_branch
          %309 = sbr.rel (%p307) target = $region36
        $region35: #{tpu_custom_call.1} parent=11 // pred_region
          _
        $region36: #{tpu_custom_call.1} parent=11 // pred_fallthru
          _
      $region12: #{tpu_custom_call.1} parent=5 // pred_fallthru
        _
      %p310 = scmp.lt.s32.totalorder %s25, 2
      // Predicated region
      $region37: #{tpu_custom_call.1} parent=5 // pred_check
        %p311 = pneg %p310
      $region38: #{tpu_custom_call.1} parent=5 // pred_check_branch
        %313 = sbr.rel (%p311) target = $region40
      $region39: #{tpu_custom_call.1} parent=5 // pred_region
        // Predicated region
        $region41: #{tpu_custom_call.1} parent=39 // pred_check
          %p314 = pneg %p45
        $region42: #{tpu_custom_call.1} parent=39 // pred_check_branch
          %316 = sbr.rel (%p314) target = $region44
        $region43: #{tpu_custom_call.1} parent=39 // pred_region
          %s317 = sand.u32 %s35, 1
          %s318 = scalar_lea.sflag [#allocation4], %s317
          %s319 = sand.u32 %s35, 1
          %s320 = smul.addr %s319, 8
          %s321 = scalar_lea.vmem [#allocation3], %s320
          %323 = vsyncadd %s318, 0
          %s324 = smul.addr %s25, 8
          %s325 = scalar_lea.hbm %s0, %s324
          %s327 = sshll.u32 %s325, 4
          %s328 = int_to_ptr.hbm [resolvable:$true] %s327
          %s329 = sshll.u32 %s321, 4
          %s330 = int_to_ptr.vmem [resolvable:$true] %s329
          %332 = dma.hbm_to_vmem [thread:$0]  %s328, 128, %s330, %s318
        $region44: #{tpu_custom_call.1} parent=39 // pred_fallthru
          _
        // Predicated region
        $region45: #{tpu_custom_call.1} parent=39 // pred_check
          %p333 = pneg %p71
        $region46: #{tpu_custom_call.1} parent=39 // pred_check_branch
          %335 = sbr.rel (%p333) target = $region48
        $region47: #{tpu_custom_call.1} parent=39 // pred_region
          %s336 = sand.u32 %s25, 1
          %s337 = scalar_lea.sflag [#allocation7], %s336
          %s338 = sand.u32 %s61, 1
          %s339 = smul.addr %s338, 8
          %s340 = scalar_lea.vmem [#allocation6], %s339
          %342 = vsyncadd %s337, 0
          %s343 = smul.addr %s25, 8
          %s344 = scalar_lea.hbm %s1, %s343
          %s346 = sshll.u32 %s344, 4
          %s347 = int_to_ptr.hbm [resolvable:$true] %s346
          %s348 = sshll.u32 %s340, 4
          %s349 = int_to_ptr.vmem [resolvable:$true] %s348
          %351 = dma.hbm_to_vmem [thread:$0]  %s347, 128, %s349, %s337
        $region48: #{tpu_custom_call.1} parent=39 // pred_fallthru
          _
        // Predicated region
        $region49: #{tpu_custom_call.1} parent=39 // pred_check
          %p352 = pneg %p97
        $region50: #{tpu_custom_call.1} parent=39 // pred_check_branch
          %354 = sbr.rel (%p352) target = $region52
        $region51: #{tpu_custom_call.1} parent=39 // pred_region
          %s355 = sand.u32 %s25, 1
          %s356 = scalar_lea.sflag [#allocation7], %s355
          %s357 = sand.u32 %s87, 1
          %s358 = smul.addr %s357, 8
          %s359 = scalar_lea.vmem [#allocation8], %s358
          %361 = vsyncadd %s356, 0
          %s362 = smul.addr %s25, 8
          %s363 = scalar_lea.hbm %s2, %s362
          %s365 = sshll.u32 %s363, 4
          %s366 = int_to_ptr.hbm [resolvable:$true] %s365
          %s367 = sshll.u32 %s359, 4
          %s368 = int_to_ptr.vmem [resolvable:$true] %s367
          %370 = dma.hbm_to_vmem [thread:$0]  %s366, 128, %s368, %s356
        $region52: #{tpu_custom_call.1} parent=39 // pred_fallthru
          _
      $region40: #{tpu_custom_call.1} parent=5 // pred_fallthru
        _
      %p371 = scmp.le.s32.totalorder 1, %s25
      %p372 = scmp.lt.s32.totalorder %s25, 3
      %p373 = pnand %p371, %p372
      %p374 = pneg %p373
      // Predicated region
      $region53: #{tpu_custom_call.1} parent=5 // pred_check
        _
      $region54: #{tpu_custom_call.1} parent=5 // pred_check_branch
        %376 = sbr.rel (%p373) target = $region56
      $region55: #{tpu_custom_call.1} parent=5 // pred_region
        %s377 = ssub.s32 %s25, 1
        %s378 = sand.u32 %s38, 1
        %s379 = scalar_lea.sflag [#allocation4], %s378
        %s380 = sand.u32 %s38, 1
        %s381 = smul.addr %s380, 8
        %s382 = scalar_lea.vmem [#allocation3], %s381
        // Predicated region
        $region57: #{tpu_custom_call.1} parent=55 // pred_check
          %p383 = pneg %p51
        $region58: #{tpu_custom_call.1} parent=55 // pred_check_branch
          %385 = sbr.rel (%p383) target = $region60
        $region59: #{tpu_custom_call.1} parent=55 // pred_region
          %387 = dma.done %s379, 128
        $region60: #{tpu_custom_call.1} parent=55 // pred_fallthru
          _
        %s388 = sand.u32 %s30, 1
        %s389 = scalar_lea.sflag [#allocation7], %s388
        %s390 = sand.u32 %s64, 1
        %s391 = smul.addr %s390, 8
        %s392 = scalar_lea.vmem [#allocation6], %s391
        // Predicated region
        $region61: #{tpu_custom_call.1} parent=55 // pred_check
          %p393 = pneg %p77
        $region62: #{tpu_custom_call.1} parent=55 // pred_check_branch
          %395 = sbr.rel (%p393) target = $region64
        $region63: #{tpu_custom_call.1} parent=55 // pred_region
          %397 = dma.done %s389, 128
        $region64: #{tpu_custom_call.1} parent=55 // pred_fallthru
          _
        %s398 = sand.u32 %s30, 1
        %s399 = scalar_lea.sflag [#allocation7], %s398
        %s400 = sand.u32 %s90, 1
        %s401 = smul.addr %s400, 8
        %s402 = scalar_lea.vmem [#allocation8], %s401
        // Predicated region
        $region65: #{tpu_custom_call.1} parent=55 // pred_check
          %p403 = pneg %p103
        $region66: #{tpu_custom_call.1} parent=55 // pred_check_branch
          %405 = sbr.rel (%p403) target = $region68
        $region67: #{tpu_custom_call.1} parent=55 // pred_region
          %407 = dma.done %s399, 128
        $region68: #{tpu_custom_call.1} parent=55 // pred_fallthru
          _
        // Predicated region
        $region69: #{tpu_custom_call.1} parent=55 // pred_check
          %p408 = pneg %p124
        $region70: #{tpu_custom_call.1} parent=55 // pred_check_branch
          %410 = sbr.rel (%p408) target = $region72
        $region71: #{tpu_custom_call.1} parent=55 // pred_region
          %412 = dma.done [#allocation10], 768
        $region72: #{tpu_custom_call.1} parent=55 // pred_fallthru
          _
        // Predicated region
        $region73: #{tpu_custom_call.1} parent=55 // pred_check
          %p413 = pneg %p166
        $region74: #{tpu_custom_call.1} parent=55 // pred_check_branch
          %415 = sbr.rel (%p413) target = $region76
        $region75: #{tpu_custom_call.1} parent=55 // pred_region
          %417 = dma.done [#allocation10], 256
        $region76: #{tpu_custom_call.1} parent=55 // pred_fallthru
          _
        %s418 = sand.u32 %s38, 1
        %s419 = scalar_lea.sflag [#allocation4], %s418
        %s420 = sand.u32 %s38, 1
        %s421 = smul.addr %s420, 8
        %s422 = scalar_lea.vmem [#allocation3], %s421
        %p423 = pneg %p51
        %p424 = pneg %p48
        %s425 = sand.u32 %s30, 1
        %s426 = scalar_lea.sflag [#allocation7], %s425
        %s427 = sand.u32 %s64, 1
        %s428 = smul.addr %s427, 8
        %s429 = scalar_lea.vmem [#allocation6], %s428
        %p430 = pneg %p77
        %p431 = pneg %p74
        %s432 = sand.u32 %s30, 1
        %s433 = scalar_lea.sflag [#allocation7], %s432
        %s434 = sand.u32 %s90, 1
        %s435 = smul.addr %s434, 8
        %s436 = scalar_lea.vmem [#allocation8], %s435
        %p437 = pneg %p103
        %p438 = pneg %p100
        %p439 = pneg %p124
        %p440 = pneg %p121
        %p441 = pneg %p145
        %p442 = pneg %p142
        %p443 = pneg %p166
        %p444 = pneg %p163
        %p445 = pneg %p187
        %p446 = pneg %p184
        %p447 = pneg %p208
        %p448 = pneg %p205
        %p449 = pneg %p229
        %p450 = pneg %p226
        %p451 = pneg %p255
        %p452 = pneg %p252
        %s453 = sand.u32 %s242, 1
        %s454 = scalar_lea.sflag [#allocation5], %s453
        %s455 = sand.u32 %s242, 1
        %s456 = smul.addr %s455, 8
        %s457 = scalar_lea.vmem [#allocation12], %s456
        %v459 = vld [vmem:[%s382] sm:$0xff]
        %v460 = vpack.c.bf16 %v459, %v459
        %v461 = vld [vmem:[%s392] sm:$0xff]
        %v462 = vpack.c.bf16 %v461, %v461
        %v463 = vld [vmem:[%s402] sm:$0xff]
        %v464 = vpack.c.bf16 %v463, %v463
        %v465 = vld [vmem:[#allocation9] sm:$0xf]
        %v466 = vld [vmem:[#allocation9 + $0x4] sm:$0xf]
        %v467 = vld [vmem:[#allocation9 + $0x8] sm:$0xf]
        %v468 = vld [vmem:[#allocation9 + $0xc] sm:$0xf]
        %v469 = vld [vmem:[%s4] sm:$0x1]
        %v471 = vperm.slane %v469, 0
        %v477 = vunpack.c.l.b16 %v465
        %v478 = vunpack.c.l.b16 %v466
        %v479 = vunpack.c.l.b16 %v467
        %v480 = vunpack.c.l.b16 %v468
        %v481 = vpack.c.b16 %v478, %v477
        %v482 = vpack.c.b16 %v480, %v479
        %vm485 = vcmask 261120
        %v487 = vsel %vm485, %v460, 0
        %489 = vmatpush.bf16.msra.mxu0 0
        %490 = vmatpush.bf16.msra.mxu0 0
        %491 = vmatpush.bf16.msra.mxu0 0
        %492 = vmatpush.bf16.msra.mxu0 0
        %493 = vmatpush.bf16.msra.mxu0 0
        %494 = vmatpush.bf16.msra.mxu0 0
        %495 = vmatpush.bf16.msra.mxu0 %v482
        %496 = vmatpush.bf16.msra.mxu0 %v481
        %497 = vmatmul.bf16.gmra.mxu0 %v487
        %v498 = vpop.f32.mrf.mxu0
        %v499 = vadd.f32 %v471, %v498
        %v500 = vpop.f32.mrf.mxu0
        %501 = vdwg.mxu0
        %s502 = scalar_lea.vmem [#allocation9], 16
        %v503 = vld [vmem:[%s502] sm:$0xf]
        %v504 = vld [vmem:[%s502 + $0x4] sm:$0xf]
        %v505 = vld [vmem:[%s502 + $0x8] sm:$0xf]
        %v506 = vld [vmem:[%s502 + $0xc] sm:$0xf]
        %s507 = scalar_lea.vmem %s4, 1
        %v508 = vld [vmem:[%s507] sm:$0x1]
        %v510 = vperm.slane %v508, 0
        %v516 = vunpack.c.l.b16 %v503
        %v517 = vunpack.c.l.b16 %v504
        %v518 = vunpack.c.l.b16 %v505
        %v519 = vunpack.c.l.b16 %v506
        %v520 = vpack.c.b16 %v517, %v516
        %v521 = vpack.c.b16 %v519, %v518
        %v525 = vsel %vm485, %v462, 0
        %527 = vmatpush.bf16.msra.mxu0 0
        %528 = vmatpush.bf16.msra.mxu0 0
        %529 = vmatpush.bf16.msra.mxu0 0
        %530 = vmatpush.bf16.msra.mxu0 0
        %531 = vmatpush.bf16.msra.mxu0 0
        %532 = vmatpush.bf16.msra.mxu0 0
        %533 = vmatpush.bf16.msra.mxu0 %v521
        %534 = vmatpush.bf16.msra.mxu0 %v520
        %535 = vmatmul.bf16.gmra.mxu0 %v525
        %v536 = vpop.f32.mrf.mxu0
        %v537 = vadd.f32 %v510, %v536
        %v538 = vpop.f32.mrf.mxu0
        %539 = vdwg.mxu0
        %s540 = scalar_lea.vmem [#allocation9], 32
        %v541 = vld [vmem:[%s540] sm:$0xf]
        %v542 = vld [vmem:[%s540 + $0x4] sm:$0xf]
        %v543 = vld [vmem:[%s540 + $0x8] sm:$0xf]
        %v544 = vld [vmem:[%s540 + $0xc] sm:$0xf]
        %s545 = scalar_lea.vmem %s4, 2
        %v546 = vld [vmem:[%s545] sm:$0x1]
        %v548 = vperm.slane %v546, 0
        %v554 = vunpack.c.l.b16 %v541
        %v555 = vunpack.c.l.b16 %v542
        %v556 = vunpack.c.l.b16 %v543
        %v557 = vunpack.c.l.b16 %v544
        %v558 = vpack.c.b16 %v555, %v554
        %v559 = vpack.c.b16 %v557, %v556
        %v563 = vsel %vm485, %v464, 0
        %565 = vmatpush.bf16.msra.mxu0 0
        %566 = vmatpush.bf16.msra.mxu0 0
        %567 = vmatpush.bf16.msra.mxu0 0
        %568 = vmatpush.bf16.msra.mxu0 0
        %569 = vmatpush.bf16.msra.mxu0 0
        %570 = vmatpush.bf16.msra.mxu0 0
        %571 = vmatpush.bf16.msra.mxu0 %v559
        %572 = vmatpush.bf16.msra.mxu0 %v558
        %573 = vmatmul.bf16.gmra.mxu0 %v563
        %v574 = vpop.f32.mrf.mxu0
        %v575 = vadd.f32 %v548, %v574
        %v576 = vpop.f32.mrf.mxu0
        %577 = vdwg.mxu0
        %v578 = vmul.f32 %v499, 0.35355338
        %v579 = vpack.c.bf16 %v578, %v578
        %v580 = vpack.c.bf16 %v537, %v537
        %v581 = vpack.c.bf16 %v575, %v575
        %vm582 = vcmask 64512
        %v584 = vsel %vm582, %v579, 0
        %v587 = vsel %vm582, %v580, 0
        %589 = vmatpush.bf16.xpose.msra.mxu0 0
        %590 = vmatpush.bf16.xpose.msra.mxu0 0
        %591 = vmatpush.bf16.xpose.msra.mxu0 0
        %592 = vmatpush.bf16.xpose.msra.mxu0 0
        %593 = vmatpush.bf16.xpose.msra.mxu0 0
        %594 = vmatpush.bf16.xpose.msra.mxu0 0
        %595 = vmatpush.bf16.xpose.msra.mxu0 0
        %596 = vmatpush.bf16.xpose.msra.mxu0 %v587
        %597 = vmatmul.bf16.gmra.mxu0 %v584
        %v598 = vpop.f32.mrf.mxu0
        %v599 = vadd.f32 0.0, %v598
        %v600 = vpop.f32.mrf.mxu0
        %601 = vdwg.mxu0
        %v602 = vsel %vm582, %v599, -inf
        %603 = vmax.xlane.f32.xlu0 %v602
        %v604 = vpop.xlane.xlu0 %603
        %v605 = vsub.f32 %v599, %v604
        %v606 = vmul.f32 %v605, 1.442695
        %v607 = vpow.pop %v606
        %v608 = vsel %vm582, %v607, 0.0
        %609 = vadd.xlane.f32.xlu0 %v608
        %v610 = vpop.xlane.xlu0 %609
        %v611 = vrcp.pop %v610
        %v612 = vmul.f32 %v607, %v611
        %v613 = vpack.c.bf16 %v612, %v612
        %v615 = vsel %vm582, %v613, 0
        %vm617 = vcmask 1043456
        %v619 = vsel %vm617, %v581, 0
        %621 = vmatpush.bf16.msra.mxu0 0
        %622 = vmatpush.bf16.msra.mxu0 0
        %623 = vmatpush.bf16.msra.mxu0 0
        %624 = vmatpush.bf16.msra.mxu0 0
        %625 = vmatpush.bf16.msra.mxu0 0
        %626 = vmatpush.bf16.msra.mxu0 0
        %627 = vmatpush.bf16.msra.mxu0 0
        %628 = vmatpush.bf16.msra.mxu0 %v619
        %629 = vmatmul.bf16.gmra.mxu0 %v615
        %v630 = vpop.f32.mrf.mxu0
        %v631 = vadd.f32 0.0, %v630
        %v632 = vpop.f32.mrf.mxu0
        %633 = vdwg.mxu0
        %634 = vst.msk [vmem:[#allocation2] sm:$0xff] %vm582, %v631
        %636 = vrot.lane.b32.xlu0 %v579, 120
        %v637 = vpop.permute.xlu0 %636
        %639 = vrot.lane.b32.xlu0 %v580, 120
        %v640 = vpop.permute.xlu0 %639
        %v642 = vsel %vm582, %v637, 0
        %v645 = vsel %vm582, %v640, 0
        %647 = vmatpush.bf16.xpose.msra.mxu0 0
        %648 = vmatpush.bf16.xpose.msra.mxu0 0
        %649 = vmatpush.bf16.xpose.msra.mxu0 0
        %650 = vmatpush.bf16.xpose.msra.mxu0 0
        %651 = vmatpush.bf16.xpose.msra.mxu0 0
        %652 = vmatpush.bf16.xpose.msra.mxu0 0
        %653 = vmatpush.bf16.xpose.msra.mxu0 0
        %654 = vmatpush.bf16.xpose.msra.mxu0 %v645
        %655 = vmatmul.bf16.gmra.mxu0 %v642
        %v656 = vpop.f32.mrf.mxu0
        %v657 = vadd.f32 0.0, %v656
        %v658 = vpop.f32.mrf.mxu0
        %659 = vdwg.mxu0
        %v660 = vsel %vm582, %v657, -inf
        %661 = vmax.xlane.f32.xlu0 %v660
        %v662 = vpop.xlane.xlu0 %661
        %v663 = vsub.f32 %v657, %v662
        %v664 = vmul.f32 %v663, 1.442695
        %v665 = vpow.pop %v664
        %v666 = vsel %vm582, %v665, 0.0
        %667 = vadd.xlane.f32.xlu0 %v666
        %v668 = vpop.xlane.xlu0 %667
        %v669 = vrcp.pop %v668
        %v670 = vmul.f32 %v665, %v669
        %v671 = vpack.c.bf16 %v670, %v670
        %673 = vrot.lane.b32.xlu0 %v581, 120
        %v674 = vpop.permute.xlu0 %673
        %v676 = vsel %vm582, %v671, 0
        %v679 = vsel %vm617, %v674, 0
        %681 = vmatpush.bf16.msra.mxu0 0
        %682 = vmatpush.bf16.msra.mxu0 0
        %683 = vmatpush.bf16.msra.mxu0 0
        %684 = vmatpush.bf16.msra.mxu0 0
        %685 = vmatpush.bf16.msra.mxu0 0
        %686 = vmatpush.bf16.msra.mxu0 0
        %687 = vmatpush.bf16.msra.mxu0 0
        %688 = vmatpush.bf16.msra.mxu0 %v679
        %689 = vmatmul.bf16.gmra.mxu0 %v676
        %v690 = vpop.f32.mrf.mxu0
        %v691 = vadd.f32 0.0, %v690
        %v692 = vpop.f32.mrf.mxu0
        %693 = vdwg.mxu0
        %695 = vrot.lane.b32.xlu0 %v691, 8
        %v696 = vpop.permute.xlu0 %695
        %vm698 = vcmask 130112
        %699 = vst.msk [vmem:[#allocation2] sm:$0xff] %vm698, %v696
        %700 = vrot.lane.b32.xlu0 %v579, 112
        %v701 = vpop.permute.xlu0 %700
        %702 = vrot.lane.b32.xlu0 %v580, 112
        %v703 = vpop.permute.xlu0 %702
        %v705 = vsel %vm582, %v701, 0
        %v708 = vsel %vm582, %v703, 0
        %710 = vmatpush.bf16.xpose.msra.mxu0 0
        %711 = vmatpush.bf16.xpose.msra.mxu0 0
        %712 = vmatpush.bf16.xpose.msra.mxu0 0
        %713 = vmatpush.bf16.xpose.msra.mxu0 0
        %714 = vmatpush.bf16.xpose.msra.mxu0 0
        %715 = vmatpush.bf16.xpose.msra.mxu0 0
        %716 = vmatpush.bf16.xpose.msra.mxu0 0
        %717 = vmatpush.bf16.xpose.msra.mxu0 %v708
        %718 = vmatmul.bf16.gmra.mxu0 %v705
        %v719 = vpop.f32.mrf.mxu0
        %v720 = vadd.f32 0.0, %v719
        %v721 = vpop.f32.mrf.mxu0
        %722 = vdwg.mxu0
        %v723 = vsel %vm582, %v720, -inf
        %724 = vmax.xlane.f32.xlu0 %v723
        %v725 = vpop.xlane.xlu0 %724
        %v726 = vsub.f32 %v720, %v725
        %v727 = vmul.f32 %v726, 1.442695
        %v728 = vpow.pop %v727
        %v729 = vsel %vm582, %v728, 0.0
        %730 = vadd.xlane.f32.xlu0 %v729
        %v731 = vpop.xlane.xlu0 %730
        %v732 = vrcp.pop %v731
        %v733 = vmul.f32 %v728, %v732
        %v734 = vpack.c.bf16 %v733, %v733
        %735 = vrot.lane.b32.xlu0 %v581, 112
        %v736 = vpop.permute.xlu0 %735
        %v738 = vsel %vm582, %v734, 0
        %v741 = vsel %vm617, %v736, 0
        %743 = vmatpush.bf16.msra.mxu0 0
        %744 = vmatpush.bf16.msra.mxu0 0
        %745 = vmatpush.bf16.msra.mxu0 0
        %746 = vmatpush.bf16.msra.mxu0 0
        %747 = vmatpush.bf16.msra.mxu0 0
        %748 = vmatpush.bf16.msra.mxu0 0
        %749 = vmatpush.bf16.msra.mxu0 0
        %750 = vmatpush.bf16.msra.mxu0 %v741
        %751 = vmatmul.bf16.gmra.mxu0 %v738
        %v752 = vpop.f32.mrf.mxu0
        %v753 = vadd.f32 0.0, %v752
        %v754 = vpop.f32.mrf.mxu0
        %755 = vdwg.mxu0
        %757 = vrot.lane.b32.xlu0 %v753, 16
        %v758 = vpop.permute.xlu0 %757
        %vm760 = vcmask 195712
        %761 = vst.msk [vmem:[#allocation2] sm:$0xff] %vm760, %v758
        %762 = vrot.lane.b32.xlu0 %v579, 104
        %v763 = vpop.permute.xlu0 %762
        %764 = vrot.lane.b32.xlu0 %v580, 104
        %v765 = vpop.permute.xlu0 %764
        %v767 = vsel %vm582, %v763, 0
        %v770 = vsel %vm582, %v765, 0
        %772 = vmatpush.bf16.xpose.msra.mxu0 0
        %773 = vmatpush.bf16.xpose.msra.mxu0 0
        %774 = vmatpush.bf16.xpose.msra.mxu0 0
        %775 = vmatpush.bf16.xpose.msra.mxu0 0
        %776 = vmatpush.bf16.xpose.msra.mxu0 0
        %777 = vmatpush.bf16.xpose.msra.mxu0 0
        %778 = vmatpush.bf16.xpose.msra.mxu0 0
        %779 = vmatpush.bf16.xpose.msra.mxu0 %v770
        %780 = vmatmul.bf16.gmra.mxu0 %v767
        %v781 = vpop.f32.mrf.mxu0
        %v782 = vadd.f32 0.0, %v781
        %v783 = vpop.f32.mrf.mxu0
        %784 = vdwg.mxu0
        %v785 = vsel %vm582, %v782, -inf
        %786 = vmax.xlane.f32.xlu0 %v785
        %v787 = vpop.xlane.xlu0 %786
        %v788 = vsub.f32 %v782, %v787
        %v789 = vmul.f32 %v788, 1.442695
        %v790 = vpow.pop %v789
        %v791 = vsel %vm582, %v790, 0.0
        %792 = vadd.xlane.f32.xlu0 %v791
        %v793 = vpop.xlane.xlu0 %792
        %v794 = vrcp.pop %v793
        %v795 = vmul.f32 %v790, %v794
        %v796 = vpack.c.bf16 %v795, %v795
        %797 = vrot.lane.b32.xlu0 %v581, 104
        %v798 = vpop.permute.xlu0 %797
        %v800 = vsel %vm582, %v796, 0
        %v803 = vsel %vm617, %v798, 0
        %805 = vmatpush.bf16.msra.mxu0 0
        %806 = vmatpush.bf16.msra.mxu0 0
        %807 = vmatpush.bf16.msra.mxu0 0
        %808 = vmatpush.bf16.msra.mxu0 0
        %809 = vmatpush.bf16.msra.mxu0 0
        %810 = vmatpush.bf16.msra.mxu0 0
        %811 = vmatpush.bf16.msra.mxu0 0
        %812 = vmatpush.bf16.msra.mxu0 %v803
        %813 = vmatmul.bf16.gmra.mxu0 %v800
        %v814 = vpop.f32.mrf.mxu0
        %v815 = vadd.f32 0.0, %v814
        %v816 = vpop.f32.mrf.mxu0
        %817 = vdwg.mxu0
        %819 = vrot.lane.b32.xlu0 %v815, 24
        %v820 = vpop.permute.xlu0 %819
        %vm822 = vcmask 261312
        %823 = vst.msk [vmem:[#allocation2] sm:$0xff] %vm822, %v820
        %v824 = vld [vmem:[#allocation2] sm:$0xff]
        %v825 = vpack.c.bf16 %v824, %v824
        %v826 = vld [vmem:[#allocation11] sm:$0xf]
        %v827 = vld [vmem:[#allocation11 + $0x4] sm:$0xf]
        %v828 = vld [vmem:[#allocation11 + $0x8] sm:$0xf]
        %v829 = vld [vmem:[#allocation11 + $0xc] sm:$0xf]
        %v830 = vld [vmem:[%s6] sm:$0x1]
        %v832 = vperm.slane %v830, 0
        %v838 = vunpack.c.l.b16 %v826
        %v839 = vunpack.c.l.b16 %v827
        %v840 = vunpack.c.l.b16 %v828
        %v841 = vunpack.c.l.b16 %v829
        %v842 = vpack.c.b16 %v839, %v838
        %v843 = vpack.c.b16 %v841, %v840
        %v847 = vsel %vm485, %v825, 0
        %849 = vmatpush.bf16.msra.mxu0 0
        %850 = vmatpush.bf16.msra.mxu0 0
        %851 = vmatpush.bf16.msra.mxu0 0
        %852 = vmatpush.bf16.msra.mxu0 0
        %853 = vmatpush.bf16.msra.mxu0 0
        %854 = vmatpush.bf16.msra.mxu0 0
        %855 = vmatpush.bf16.msra.mxu0 %v843
        %856 = vmatpush.bf16.msra.mxu0 %v842
        %857 = vmatmul.bf16.gmra.mxu0 %v847
        %v858 = vpop.f32.mrf.mxu0
        %v859 = vadd.f32 %v832, %v858
        %v860 = vpop.f32.mrf.mxu0
        %861 = vdwg.mxu0
        %v862 = vadd.f32 %v459, %v859
        %v863 = vsel %vm485, %v862, 0.0
        %864 = vadd.xlane.f32.xlu0 %v863
        %v865 = vpop.xlane.xlu0 %864
        %v866 = vrcp.pop 32.0
        %v867 = vmul.f32 32.0, %v866
        %v868 = vsub.f32 1.0, %v867
        %v869 = vmul.f32 %v866, %v868
        %v870 = vadd.f32 %v866, %v869
        %vm871 = vweird.f32 %v866
        %v872 = vsel %vm871, %v866, %v870
        %v873 = vmul.f32 %v865, %v872
        %v874 = vsub.f32 %v862, %v873
        %v875 = vmul.f32 %v874, %v874
        %v876 = vsel %vm485, %v875, 0.0
        %877 = vadd.xlane.f32.xlu0 %v876
        %v878 = vpop.xlane.xlu0 %877
        %v879 = vmul.f32 %v878, %v872
        %v880 = vadd.f32 %v879, 1e-05
        %v881 = vrsqrt.pop %v880
        %v882 = vmul.f32 %v881, %v880
        %v883 = vmul.f32 %v882, %v881
        %v884 = vmul.f32 0.5, %v883
        %v885 = vsub.f32 1.5, %v884
        %v886 = vmul.f32 %v881, %v885
        %vm887 = vweird.f32 %v880
        %vm888 = vweird.f32 %v881
        %vm889 = vmor %vm887, %vm888
        %v890 = vsel %vm889, %v881, %v886
        %v891 = vmul.f32 %v874, %v890
        %v892 = vld [vmem:[%s7] sm:$0x1]
        %v894 = vperm.slane %v892, 0
        %v896 = vmul.f32 %v891, %v894
        %v897 = vld [vmem:[%s8] sm:$0x1]
        %v899 = vperm.slane %v897, 0
        %v901 = vadd.f32 %v896, %v899
        %902 = vst.msk [vmem:[%s457] sm:$0xff] %vm485, %v901
        %s903 = sand.u32 %s242, 1
        %s904 = scalar_lea.sflag [#allocation5], %s903
        %s905 = sand.u32 %s242, 1
        %s906 = smul.addr %s905, 8
        %s907 = scalar_lea.vmem [#allocation12], %s906
        // Predicated region
        $region77: #{tpu_custom_call.1} parent=55 // pred_check
          %p908 = pneg %p252
        $region78: #{tpu_custom_call.1} parent=55 // pred_check_branch
          %910 = sbr.rel (%p908) target = $region80
        $region79: #{tpu_custom_call.1} parent=55 // pred_region
          %912 = vsyncadd %s904, 0
          %s913 = smul.addr %s30, 8
          %s914 = scalar_lea.hbm %s9, %s913
          %s916 = sshll.u32 %s907, 4
          %s917 = int_to_ptr.vmem [resolvable:$true] %s916
          %s918 = sshll.u32 %s914, 4
          %s919 = int_to_ptr.hbm [resolvable:$true] %s918
          %921 = dma.vmem_to_hbm [thread:$0]  %s917, 128, %s919, %s904
        $region80: #{tpu_custom_call.1} parent=55 // pred_fallthru
          _
      $region56: #{tpu_custom_call.1} parent=5 // pred_fallthru
        _
      %p922 = scmp.le.s32.totalorder 2, %s25
      // Predicated region
      $region81: #{tpu_custom_call.1} parent=5 // pred_check
        %p923 = pneg %p922
      $region82: #{tpu_custom_call.1} parent=5 // pred_check_branch
        %925 = sbr.rel (%p923) target = $region84
      $region83: #{tpu_custom_call.1} parent=5 // pred_region
        %s926 = ssub.s32 %s25, 2
        // Predicated region
        $region85: #{tpu_custom_call.1} parent=83 // pred_check
          %p927 = pneg %p258
        $region86: #{tpu_custom_call.1} parent=83 // pred_check_branch
          %929 = sbr.rel (%p927) target = $region88
        $region87: #{tpu_custom_call.1} parent=83 // pred_region
          %s930 = sand.u32 %s243, 1
          %s931 = scalar_lea.sflag [#allocation5], %s930
          %s932 = sand.u32 %s243, 1
          %s933 = smul.addr %s932, 8
          %s934 = scalar_lea.vmem [#allocation12], %s933
          %936 = dma.done %s931, 128
        $region88: #{tpu_custom_call.1} parent=83 // pred_fallthru
          _
      $region84: #{tpu_custom_call.1} parent=5 // pred_fallthru
        _
    $region6: #{tpu_custom_call.1} parent=1 // loop_footer
      %s29 = sadd.s32 1, %s25
    $region7: #{tpu_custom_call.1} parent=1 // loop_footer_branch
      %24 = sbr.rel target = $region3
    $region8: #{tpu_custom_call.1} parent=1 // loop_exit
      _
    %937 = vsyncpa [#allocation4], 1
    %s938 = scalar_lea.sflag [#allocation4], 1
    %939 = vsyncpa %s938, 1
    %940 = vsyncpa [#allocation7], 1
    %s941 = scalar_lea.sflag [#allocation7], 1
    %942 = vsyncpa %s941, 1
    %943 = vsyncpa [#allocation10], 1
    %944 = vsyncpa [#allocation5], 1
    %s945 = scalar_lea.sflag [#allocation5], 1
    %946 = vsyncpa %s945, 1

</llo_original>
